<compile_context>
chip_gen: v6e
topology: v6e:2x2x1
jax: 0.10.0
libtpu: 0.0.40
codegen_flags: <defaults>
</compile_context>

<pallas_src>
import jax
import jax.numpy as jnp
from jax import lax
from jax.experimental import pallas as pl
from jax.experimental.pallas import tpu as pltpu

SCALE_FACTOR = 0.1


def _attn_kernel(q_ref, k_ref, v_ref, w_ref, b_ref, o_ref):
    # Per-instance blocks: q/k/v_ref are [1, S, 5], w_ref [5, 10], b_ref [1, 10].
    w = w_ref[...]
    b = b_ref[...]

    # Shared Linear(5, 10) on q, k, v (three tiny MXU pushes).
    qp = jnp.dot(q_ref[0], w, preferred_element_type=jnp.float32) + b  # [S, 10]
    kp = jnp.dot(k_ref[0], w, preferred_element_type=jnp.float32) + b  # [S, 10]
    vp = jnp.dot(v_ref[0], w, preferred_element_type=jnp.float32) + b  # [S, 10]

    # qk = qp @ kp^T without materializing kp.T (contract last dims on MXU).
    qk = lax.dot_general(qp, kp, (((1,), (1,)), ((), ())),
                         preferred_element_type=jnp.float32)           # [S, S]
    qk = qk * SCALE_FACTOR

    # Numerically stable, EXACT softmax along the last dim.
    m = jnp.max(qk, axis=-1, keepdims=True)
    e = jnp.exp(qk - m)
    p = e / jnp.sum(e, axis=-1, keepdims=True)

    # dropout(p=0.2) in eval mode == identity; then attend over v.
    o_ref[0] = jnp.dot(p, vp, preferred_element_type=jnp.float32)      # [S, 10]


def model_forward(q, k, v, w, b):
    """Batched forward.

    q, k, v: [B, S, 5] f32 (a leading batch of independent problems),
             or [S, 5] f32 for a single instance.
    w: [5, 10] f32 (Linear weight, pre-transposed); b: [10] f32.
    Returns [B, S, 10] (or [S, 10] if the inputs were 2-D).
    """
    squeeze = q.ndim == 2
    if squeeze:
        q, k, v = q[None], k[None], v[None]

    B, S, d_in = q.shape
    d_out = w.shape[1]
    b2 = b.reshape(1, d_out)  # [1, 10], broadcasts over rows in-kernel

    out = pl.pallas_call(
        _attn_kernel,
        out_shape=jax.ShapeDtypeStruct((B, S, d_out), jnp.float32),
        grid=(B,),
        in_specs=[
            pl.BlockSpec((1, S, d_in), lambda i: (i, 0, 0)),
            pl.BlockSpec((1, S, d_in), lambda i: (i, 0, 0)),
            pl.BlockSpec((1, S, d_in), lambda i: (i, 0, 0)),
            pl.BlockSpec((d_in, d_out), lambda i: (0, 0)),
            pl.BlockSpec((1, d_out), lambda i: (0, 0)),
        ],
        out_specs=pl.BlockSpec((1, S, d_out), lambda i: (i, 0, 0)),
        compiler_params=pltpu.CompilerParams(
            dimension_semantics=("parallel",)),
    )(q, k, v, w, b2)

    return out[0] if squeeze else out


def _reference(q, k, v, w, b):
    qp = q @ w + b
    kp = k @ w + b
    vp = v @ w + b
    qk = jnp.einsum('...qd,...kd->...qk', qp, kp) * SCALE_FACTOR
    p = jax.nn.softmax(qk, axis=-1)
    return jnp.einsum('...qk,...kd->...qd', p, vp)


if __name__ == "__main__":
    key = jax.random.PRNGKey(0)
    k0, k1, k2, k3, k4 = jax.random.split(key, 5)

    B, S, D_IN, D_OUT = 4, 8, 5, 10
    q = jax.random.normal(k0, (B, S, D_IN), dtype=jnp.float32)
    k = jax.random.normal(k1, (B, S, D_IN), dtype=jnp.float32)
    v = jax.random.normal(k2, (B, S, D_IN), dtype=jnp.float32)

    # Deterministic Linear(5, 10) parameters (W stored pre-transposed: [5, 10]).
    bound = 1.0 / (D_IN ** 0.5)
    w = jax.random.uniform(k3, (D_IN, D_OUT), jnp.float32, -bound, bound)
    b = jax.random.uniform(k4, (D_OUT,), jnp.float32, -bound, bound)

    out = model_forward(q, k, v, w, b)
    out = jax.block_until_ready(out)

    ref = _reference(q, k, v, w, b)
    assert out.shape == (B, S, D_OUT)
    assert jnp.allclose(out, ref, atol=1e-5, rtol=1e-5), float(
        jnp.max(jnp.abs(out - ref)))

    # Also check the single-instance (2-D) path, matching the module's call.
    out1 = jax.block_until_ready(model_forward(q[0], k[0], v[0], w, b))
    assert out1.shape == (S, D_OUT)
    assert jnp.allclose(out1, ref[0], atol=1e-5, rtol=1e-5)

    print("KERNEL_OK")
</pallas_src>

<mosaic_0001>
module attributes {stable_mosaic.version = 11 : i64} {
  func.func @_attn_kernel(%arg0: i32, %arg1: memref<1x8x5xf32, #tpu.memory_space<vmem>>, %arg2: memref<1x8x5xf32, #tpu.memory_space<vmem>>, %arg3: memref<1x8x5xf32, #tpu.memory_space<vmem>>, %arg4: memref<5x10xf32, #tpu.memory_space<vmem>>, %arg5: memref<1x10xf32, #tpu.memory_space<vmem>>, %arg6: memref<1x8x10xf32, #tpu.memory_space<vmem>>) attributes {dimension_semantics = [#tpu.dimension_semantics<parallel>], iteration_bounds = array<i64: 4>, scalar_prefetch = 0 : i64, scratch_operands = 0 : i64, tpu.core_type = #tpu.core_type<tc>, window_params = [{transform_indices = @transform_0, window_bounds = array<i64: 1, 8, 5>}, {transform_indices = @transform_1, window_bounds = array<i64: 1, 8, 5>}, {transform_indices = @transform_2, window_bounds = array<i64: 1, 8, 5>}, {pipeline_mode = #tpu.pipeline_mode<synchronous>, transform_indices = @transform_3, window_bounds = array<i64: 5, 10>}, {pipeline_mode = #tpu.pipeline_mode<synchronous>, transform_indices = @transform_4, window_bounds = array<i64: 1, 10>}, {transform_indices = @transform_5, window_bounds = array<i64: 1, 8, 10>}]} {
    %c0 = arith.constant 0 : index
    %c0_0 = arith.constant 0 : index
    %0 = vector.load %arg4[%c0, %c0_0] : memref<5x10xf32, #tpu.memory_space<vmem>>, vector<5x10xf32>
    %c0_1 = arith.constant 0 : index
    %c0_2 = arith.constant 0 : index
    %1 = vector.load %arg5[%c0_1, %c0_2] : memref<1x10xf32, #tpu.memory_space<vmem>>, vector<1x10xf32>
    %c0_3 = arith.constant 0 : index
    %c0_4 = arith.constant 0 : index
    %c0_5 = arith.constant 0 : index
    %2 = vector.load %arg1[%c0_3, %c0_4, %c0_5] : memref<1x8x5xf32, #tpu.memory_space<vmem>>, vector<1x8x5xf32>
    %3 = vector.shape_cast %2 : vector<1x8x5xf32> to vector<8x5xf32>
    %cst = arith.constant dense<0.000000e+00> : vector<8x10xf32>
    %4 = tpu.matmul %3, %0, %cst {dimension_numbers = #tpu.dot_dimension_numbers<[1], [0], [0], [1], [0, 0, 1, 1], [], []>} : vector<8x5xf32>, vector<5x10xf32>, vector<8x10xf32> -> vector<8x10xf32>
    %5 = vector.broadcast %1 : vector<1x10xf32> to vector<8x10xf32>
    %6 = arith.addf %4, %5 : vector<8x10xf32>
    %c0_6 = arith.constant 0 : index
    %c0_7 = arith.constant 0 : index
    %c0_8 = arith.constant 0 : index
    %7 = vector.load %arg2[%c0_6, %c0_7, %c0_8] : memref<1x8x5xf32, #tpu.memory_space<vmem>>, vector<1x8x5xf32>
    %8 = vector.shape_cast %7 : vector<1x8x5xf32> to vector<8x5xf32>
    %cst_9 = arith.constant dense<0.000000e+00> : vector<8x10xf32>
    %9 = tpu.matmul %8, %0, %cst_9 {dimension_numbers = #tpu.dot_dimension_numbers<[1], [0], [0], [1], [0, 0, 1, 1], [], []>} : vector<8x5xf32>, vector<5x10xf32>, vector<8x10xf32> -> vector<8x10xf32>
    %10 = vector.broadcast %1 : vector<1x10xf32> to vector<8x10xf32>
    %11 = arith.addf %9, %10 : vector<8x10xf32>
    %c0_10 = arith.constant 0 : index
    %c0_11 = arith.constant 0 : index
    %c0_12 = arith.constant 0 : index
    %12 = vector.load %arg3[%c0_10, %c0_11, %c0_12] : memref<1x8x5xf32, #tpu.memory_space<vmem>>, vector<1x8x5xf32>
    %13 = vector.shape_cast %12 : vector<1x8x5xf32> to vector<8x5xf32>
    %cst_13 = arith.constant dense<0.000000e+00> : vector<8x10xf32>
    %14 = tpu.matmul %13, %0, %cst_13 {dimension_numbers = #tpu.dot_dimension_numbers<[1], [0], [0], [1], [0, 0, 1, 1], [], []>} : vector<8x5xf32>, vector<5x10xf32>, vector<8x10xf32> -> vector<8x10xf32>
    %15 = vector.broadcast %1 : vector<1x10xf32> to vector<8x10xf32>
    %16 = arith.addf %14, %15 : vector<8x10xf32>
    %cst_14 = arith.constant dense<0.000000e+00> : vector<8x8xf32>
    %17 = tpu.matmul %6, %11, %cst_14 {dimension_numbers = #tpu.dot_dimension_numbers<[1], [1], [0], [0], [0, 0, 1, 0], [], []>} : vector<8x10xf32>, vector<8x10xf32>, vector<8x8xf32> -> vector<8x8xf32>
    %cst_15 = arith.constant 1.000000e-01 : f32
    %18 = vector.broadcast %cst_15 : f32 to vector<8x8xf32>
    %19 = arith.mulf %17, %18 : vector<8x8xf32>
    %cst_16 = arith.constant dense<0xFF800000> : vector<8xf32>
    %20 = vector.multi_reduction <maximumf>, %19, %cst_16 [1] : vector<8x8xf32> to vector<8xf32>
    %21 = vector.shape_cast %20 : vector<8xf32> to vector<8x1xf32>
    %22 = vector.broadcast %21 : vector<8x1xf32> to vector<8x8xf32>
    %23 = arith.subf %19, %22 : vector<8x8xf32>
    %24 = math.exp %23 : vector<8x8xf32>
    %cst_17 = arith.constant dense<0.000000e+00> : vector<8xf32>
    %25 = vector.multi_reduction <add>, %24, %cst_17 [1] : vector<8x8xf32> to vector<8xf32>
    %26 = vector.shape_cast %25 : vector<8xf32> to vector<8x1xf32>
    %27 = vector.broadcast %26 : vector<8x1xf32> to vector<8x8xf32>
    %28 = arith.divf %24, %27 : vector<8x8xf32>
    %cst_18 = arith.constant dense<0.000000e+00> : vector<8x10xf32>
    %29 = tpu.matmul %28, %16, %cst_18 {dimension_numbers = #tpu.dot_dimension_numbers<[1], [0], [0], [1], [0, 0, 1, 1], [], []>} : vector<8x8xf32>, vector<8x10xf32>, vector<8x10xf32> -> vector<8x10xf32>
    %c0_19 = arith.constant 0 : index
    %c0_20 = arith.constant 0 : index
    %c0_21 = arith.constant 0 : index
    %30 = vector.load %arg6[%c0_19, %c0_20, %c0_21] : memref<1x8x10xf32, #tpu.memory_space<vmem>>, vector<1x8x10xf32>
    %31 = vector.shape_cast %30 : vector<1x8x10xf32> to vector<8x10xf32>
    %32 = vector.shape_cast %29 : vector<8x10xf32> to vector<1x8x10xf32>
    tpu.vector_store %arg6[%c0_19, %c0_20, %c0_21], %32 {strides = array<i32>} : memref<1x8x10xf32, #tpu.memory_space<vmem>>, vector<1x8x10xf32>,
    return
  }
  func.func @transform_0(%arg0: i32) -> (i32, i32, i32) {
    %c0_i32 = arith.constant 0 : i32
    %c0_i32_0 = arith.constant 0 : i32
    %c0_i32_1 = arith.constant 0 : i32
    return %arg0, %c0_i32, %c0_i32_0 : i32, i32, i32
  }
  func.func @transform_1(%arg0: i32) -> (i32, i32, i32) {
    %c0_i32 = arith.constant 0 : i32
    %c0_i32_0 = arith.constant 0 : i32
    %c0_i32_1 = arith.constant 0 : i32
    return %arg0, %c0_i32, %c0_i32_0 : i32, i32, i32
  }
  func.func @transform_2(%arg0: i32) -> (i32, i32, i32) {
    %c0_i32 = arith.constant 0 : i32
    %c0_i32_0 = arith.constant 0 : i32
    %c0_i32_1 = arith.constant 0 : i32
    return %arg0, %c0_i32, %c0_i32_0 : i32, i32, i32
  }
  func.func @transform_3(%arg0: i32) -> (i32, i32) {
    %c0_i32 = arith.constant 0 : i32
    %c0_i32_0 = arith.constant 0 : i32
    %c0_i32_1 = arith.constant 0 : i32
    return %c0_i32, %c0_i32_0 : i32, i32
  }
  func.func @transform_4(%arg0: i32) -> (i32, i32) {
    %c0_i32 = arith.constant 0 : i32
    %c0_i32_0 = arith.constant 0 : i32
    %c0_i32_1 = arith.constant 0 : i32
    return %c0_i32, %c0_i32_0 : i32, i32
  }
  func.func @transform_5(%arg0: i32) -> (i32, i32, i32) {
    %c0_i32 = arith.constant 0 : i32
    %c0_i32_0 = arith.constant 0 : i32
    %c0_i32_1 = arith.constant 0 : i32
    return %arg0, %c0_i32, %c0_i32_0 : i32, i32, i32
  }
}

</mosaic_0001>

<llo_original>
// kernel: tpu_custom_call.1
$region0: #{tpu_custom_call.1}
  #allocation0 [shape = 'u32[]', space=smem, size = 0x4, offset = 0x4, fixed_abs, tag = 'smem constant byte address 0x4 - core index']
  #allocation1 [shape = 'u32[144,128]{1,0:T(1,128)}', space=vmem, size = 0x12000, scoped, tag = 'internal scratch']
  %s0 = inlined_call_operand.vmem [shape: f32[4,8,5], index: 0, kind: input, shape index: {}]
  %s1 = inlined_call_operand.vmem [shape: f32[4,8,5], index: 1, kind: input, shape index: {}]
  %s2 = inlined_call_operand.vmem [shape: f32[4,8,5], index: 2, kind: input, shape index: {}]
  %s3 = inlined_call_operand.vmem [shape: f32[5,10], index: 3, kind: input, shape index: {}]
  %s4 = inlined_call_operand.vmem [shape: f32[1,10], index: 4, kind: input, shape index: {}]
  %s5 = inlined_call_operand.hbm [shape: f32[4,8,10], index: 5, kind: output, shape index: {}]
  %s6 = sld [smem:[#allocation0]]
  $region53: #{tpu_custom_call.1} parent=0
    _
  %s8 = ssub.s32 1, %s6
  %s9 = scalar_select 0, %s8, %s6
  $region1: #{tpu_custom_call.1} parent=0
    #allocation2 [shape = 'u8[8192]{0}', space=vmem, size = 0x2000, scoped, tag = 'output window, operand 0']
    #allocation3 [shape = 's32[2]{0}', space=sflag, size = 0x8, scoped, tag = 'scoped memory for tpu_custom_call.1']
    %10 = vsyncpa [#allocation3], 0
    %s11 = scalar_lea.sflag [#allocation3], 1
    %12 = vsyncpa %s11, 0
    loop: start=0, step=1, limit=6
    $region2: #{tpu_custom_call.1} parent=1 // loop_pre_header
      _
    $region3: #{tpu_custom_call.1} parent=1 // loop_header
      %s14 = sphi 0, %s18
      %p15 = scmp.ge.s32.totalorder %s14, 6
      %s24 = sphi 0, %s26
      %s27 = sphi 0, %s24
      %s28 = sphi 0, %s27
      %s44 = sphi 0, %s28
      %s50 = sphi 0, %s52
      %s53 = sphi 0, %s50
      %s54 = sphi 0, %s53
      %s70 = sphi 0, %s54
      %s76 = sphi 0, %s78
      %s79 = sphi 0, %s76
      %s80 = sphi 0, %s79
      %s96 = sphi 0, %s80
      %s100 = sphi 0, %s100
      %s102 = sphi 0, %s100
      %s103 = sphi 0, %s102
      %s117 = sphi 0, %s103
      %s121 = sphi 0, %s121
      %s123 = sphi 0, %s121
      %s124 = sphi 0, %s123
      %s138 = sphi 0, %s124
      %s144 = sphi 0, %s146
      %s147 = sphi 0, %s144
      %s148 = sphi 0, %s147
      %s164 = sphi 0, %s148
    $region4: #{tpu_custom_call.1} parent=1 // loop_header_branch
      %17 = sbr.rel (%p15) target = $region8
    $region5: #{tpu_custom_call.1} parent=1 // loop_body
      %s19 = ssub.s32 %s14, 1
      %s20 = ssub.s32 %s14, 2
      %s21 = sadd.s32 %s14, 1
      %s22 = ssub.s32 %s14, %s21
      %p23 = scmp.eq.s32.totalorder %s22, 0
      %s25 = sadd.s32 %s24, 1
      %s26 = scalar_select %p23, %s24, %s25
      %p29 = pneg %p23
      %p30 = scmp.eq.s32.totalorder %s14, 3
      %p31 = por %p29, %p30
      %p32 = scmp.ne.s32.totalorder %s24, %s27
      %p33 = scmp.eq.s32.totalorder %s14, 0
      %p34 = por %p32, %p33
      %p35 = scmp.ne.s32.totalorder %s24, %s27
      %p36 = scmp.eq.s32.totalorder %s19, 3
      %p37 = por %p35, %p36
      %p38 = scmp.ne.s32.totalorder %s27, %s28
      %p39 = scmp.eq.s32.totalorder %s19, 0
      %p40 = por %p38, %p39
      %p41 = scmp.ne.s32.totalorder %s27, %s28
      %p42 = scmp.eq.s32.totalorder %s20, 3
      %p43 = por %p41, %p42
      %p45 = scmp.ne.s32.totalorder %s28, %s44
      %p46 = scmp.eq.s32.totalorder %s20, 0
      %p47 = por %p45, %p46
      %s48 = ssub.s32 %s14, %s21
      %p49 = scmp.eq.s32.totalorder %s48, 0
      %s51 = sadd.s32 %s50, 1
      %s52 = scalar_select %p49, %s50, %s51
      %p55 = pneg %p49
      %p56 = scmp.eq.s32.totalorder %s14, 3
      %p57 = por %p55, %p56
      %p58 = scmp.ne.s32.totalorder %s50, %s53
      %p59 = scmp.eq.s32.totalorder %s14, 0
      %p60 = por %p58, %p59
      %p61 = scmp.ne.s32.totalorder %s50, %s53
      %p62 = scmp.eq.s32.totalorder %s19, 3
      %p63 = por %p61, %p62
      %p64 = scmp.ne.s32.totalorder %s53, %s54
      %p65 = scmp.eq.s32.totalorder %s19, 0
      %p66 = por %p64, %p65
      %p67 = scmp.ne.s32.totalorder %s53, %s54
      %p68 = scmp.eq.s32.totalorder %s20, 3
      %p69 = por %p67, %p68
      %p71 = scmp.ne.s32.totalorder %s54, %s70
      %p72 = scmp.eq.s32.totalorder %s20, 0
      %p73 = por %p71, %p72
      %s74 = ssub.s32 %s14, %s21
      %p75 = scmp.eq.s32.totalorder %s74, 0
      %s77 = sadd.s32 %s76, 1
      %s78 = scalar_select %p75, %s76, %s77
      %p81 = pneg %p75
      %p82 = scmp.eq.s32.totalorder %s14, 3
      %p83 = por %p81, %p82
      %p84 = scmp.ne.s32.totalorder %s76, %s79
      %p85 = scmp.eq.s32.totalorder %s14, 0
      %p86 = por %p84, %p85
      %p87 = scmp.ne.s32.totalorder %s76, %s79
      %p88 = scmp.eq.s32.totalorder %s19, 3
      %p89 = por %p87, %p88
      %p90 = scmp.ne.s32.totalorder %s79, %s80
      %p91 = scmp.eq.s32.totalorder %s19, 0
      %p92 = por %p90, %p91
      %p93 = scmp.ne.s32.totalorder %s79, %s80
      %p94 = scmp.eq.s32.totalorder %s20, 3
      %p95 = por %p93, %p94
      %p97 = scmp.ne.s32.totalorder %s80, %s96
      %p98 = scmp.eq.s32.totalorder %s20, 0
      %p99 = por %p97, %p98
      %s101 = sadd.s32 %s100, 1
      %p104 = scmp.eq.s32.totalorder %s14, 3
      %p105 = scmp.ne.s32.totalorder %s100, %s102
      %p106 = scmp.eq.s32.totalorder %s14, 0
      %p107 = por %p105, %p106
      %p108 = scmp.ne.s32.totalorder %s100, %s102
      %p109 = scmp.eq.s32.totalorder %s19, 3
      %p110 = por %p108, %p109
      %p111 = scmp.ne.s32.totalorder %s102, %s103
      %p112 = scmp.eq.s32.totalorder %s19, 0
      %p113 = por %p111, %p112
      %p114 = scmp.ne.s32.totalorder %s102, %s103
      %p115 = scmp.eq.s32.totalorder %s20, 3
      %p116 = por %p114, %p115
      %p118 = scmp.ne.s32.totalorder %s103, %s117
      %p119 = scmp.eq.s32.totalorder %s20, 0
      %p120 = por %p118, %p119
      %s122 = sadd.s32 %s121, 1
      %p125 = scmp.eq.s32.totalorder %s14, 3
      %p126 = scmp.ne.s32.totalorder %s121, %s123
      %p127 = scmp.eq.s32.totalorder %s14, 0
      %p128 = por %p126, %p127
      %p129 = scmp.ne.s32.totalorder %s121, %s123
      %p130 = scmp.eq.s32.totalorder %s19, 3
      %p131 = por %p129, %p130
      %p132 = scmp.ne.s32.totalorder %s123, %s124
      %p133 = scmp.eq.s32.totalorder %s19, 0
      %p134 = por %p132, %p133
      %p135 = scmp.ne.s32.totalorder %s123, %s124
      %p136 = scmp.eq.s32.totalorder %s20, 3
      %p137 = por %p135, %p136
      %p139 = scmp.ne.s32.totalorder %s124, %s138
      %p140 = scmp.eq.s32.totalorder %s20, 0
      %p141 = por %p139, %p140
      %s142 = ssub.s32 %s14, %s21
      %p143 = scmp.eq.s32.totalorder %s142, 0
      %s145 = sadd.s32 %s144, 1
      %s146 = scalar_select %p143, %s144, %s145
      %p149 = pneg %p143
      %p150 = scmp.eq.s32.totalorder %s14, 3
      %p151 = por %p149, %p150
      %p152 = scmp.ne.s32.totalorder %s144, %s147
      %p153 = scmp.eq.s32.totalorder %s14, 0
      %p154 = por %p152, %p153
      %p155 = scmp.ne.s32.totalorder %s144, %s147
      %p156 = scmp.eq.s32.totalorder %s19, 3
      %p157 = por %p155, %p156
      %p158 = scmp.ne.s32.totalorder %s147, %s148
      %p159 = scmp.eq.s32.totalorder %s19, 0
      %p160 = por %p158, %p159
      %p161 = scmp.ne.s32.totalorder %s147, %s148
      %p162 = scmp.eq.s32.totalorder %s20, 3
      %p163 = por %p161, %p162
      %p165 = scmp.ne.s32.totalorder %s148, %s164
      %p166 = scmp.eq.s32.totalorder %s20, 0
      %p167 = por %p165, %p166
      %p168 = scmp.le.s32.totalorder 1, %s14
      %p169 = scmp.lt.s32.totalorder %s14, 5
      %p170 = pnand %p168, %p169
      %p171 = pneg %p170
      // Predicated region
      $region9: #{tpu_custom_call.1} parent=5 // pred_check
        _
      $region10: #{tpu_custom_call.1} parent=5 // pred_check_branch
        %173 = sbr.rel (%p170) target = $region12
      $region11: #{tpu_custom_call.1} parent=5 // pred_region
        %s174 = ssub.s32 %s14, 1
        // Predicated region
        $region13: #{tpu_custom_call.1} parent=11 // pred_check
          %p175 = pneg %p113
        $region14: #{tpu_custom_call.1} parent=11 // pred_check_branch
          %177 = sbr.rel (%p175) target = $region16
        $region15: #{tpu_custom_call.1} parent=11 // pred_region
          _
        $region16: #{tpu_custom_call.1} parent=11 // pred_fallthru
          _
        // Predicated region
        $region17: #{tpu_custom_call.1} parent=11 // pred_check
          %p178 = pneg %p134
        $region18: #{tpu_custom_call.1} parent=11 // pred_check_branch
          %180 = sbr.rel (%p178) target = $region20
        $region19: #{tpu_custom_call.1} parent=11 // pred_region
          _
        $region20: #{tpu_custom_call.1} parent=11 // pred_fallthru
          _
      $region12: #{tpu_custom_call.1} parent=5 // pred_fallthru
        _
      %p181 = scmp.lt.s32.totalorder %s14, 4
      // Predicated region
      $region21: #{tpu_custom_call.1} parent=5 // pred_check
        %p182 = pneg %p181
      $region22: #{tpu_custom_call.1} parent=5 // pred_check_branch
        %184 = sbr.rel (%p182) target = $region24
      $region23: #{tpu_custom_call.1} parent=5 // pred_region
        // Predicated region
        $region25: #{tpu_custom_call.1} parent=23 // pred_check
          %p185 = pneg %p34
        $region26: #{tpu_custom_call.1} parent=23 // pred_check_branch
          %187 = sbr.rel (%p185) target = $region28
        $region27: #{tpu_custom_call.1} parent=23 // pred_region
          %p188 = scmp.lt.s32.totalorder %s14, 3
          %s189 = scalar_select %p188, %s14, 3
          %s190 = smul.addr %s189, 8
          %s191 = scalar_lea.vmem %s0, %s190
        $region28: #{tpu_custom_call.1} parent=23 // pred_fallthru
          _
        // Predicated region
        $region29: #{tpu_custom_call.1} parent=23 // pred_check
          %p192 = pneg %p60
        $region30: #{tpu_custom_call.1} parent=23 // pred_check_branch
          %194 = sbr.rel (%p192) target = $region32
        $region31: #{tpu_custom_call.1} parent=23 // pred_region
          %p195 = scmp.lt.s32.totalorder %s14, 3
          %s196 = scalar_select %p195, %s14, 3
          %s197 = smul.addr %s196, 8
          %s198 = scalar_lea.vmem %s1, %s197
        $region32: #{tpu_custom_call.1} parent=23 // pred_fallthru
          _
        // Predicated region
        $region33: #{tpu_custom_call.1} parent=23 // pred_check
          %p199 = pneg %p86
        $region34: #{tpu_custom_call.1} parent=23 // pred_check_branch
          %201 = sbr.rel (%p199) target = $region36
        $region35: #{tpu_custom_call.1} parent=23 // pred_region
          %p202 = scmp.lt.s32.totalorder %s14, 3
          %s203 = scalar_select %p202, %s14, 3
          %s204 = smul.addr %s203, 8
          %s205 = scalar_lea.vmem %s2, %s204
        $region36: #{tpu_custom_call.1} parent=23 // pred_fallthru
          _
      $region24: #{tpu_custom_call.1} parent=5 // pred_fallthru
        _
      %p206 = scmp.le.s32.totalorder 1, %s14
      %p207 = scmp.lt.s32.totalorder %s14, 5
      %p208 = pnand %p206, %p207
      %p209 = pneg %p208
      // Predicated region
      $region37: #{tpu_custom_call.1} parent=5 // pred_check
        _
      $region38: #{tpu_custom_call.1} parent=5 // pred_check_branch
        %211 = sbr.rel (%p208) target = $region40
      $region39: #{tpu_custom_call.1} parent=5 // pred_region
        %s212 = ssub.s32 %s14, 1
        %p213 = scmp.lt.s32.totalorder %s19, 3
        %s214 = scalar_select %p213, %s19, 3
        %s215 = smul.addr %s214, 8
        %s216 = scalar_lea.vmem %s0, %s215
        %p217 = pneg %p40
        %p218 = pneg %p37
        %p219 = scmp.lt.s32.totalorder %s19, 3
        %s220 = scalar_select %p219, %s19, 3
        %s221 = smul.addr %s220, 8
        %s222 = scalar_lea.vmem %s1, %s221
        %p223 = pneg %p66
        %p224 = pneg %p63
        %p225 = scmp.lt.s32.totalorder %s19, 3
        %s226 = scalar_select %p225, %s19, 3
        %s227 = smul.addr %s226, 8
        %s228 = scalar_lea.vmem %s2, %s227
        %p229 = pneg %p92
        %p230 = pneg %p89
        %p231 = pneg %p113
        %p232 = pneg %p110
        %p233 = pneg %p134
        %p234 = pneg %p131
        %p235 = pneg %p160
        %p236 = pneg %p157
        %s237 = sand.u32 %s147, 1
        %s238 = scalar_lea.sflag [#allocation3], %s237
        %s239 = sand.u32 %s147, 1
        %s240 = smul.addr %s239, 8
        %s241 = scalar_lea.vmem [#allocation2], %s240
        %p242 = scmp.lt.s32.totalorder %s19, 3
        %s243 = scalar_select %p242, %s19, 3
        %s244 = smul.addr %s243, 8
        %s245 = scalar_lea.vmem %s0, %s244
        %p246 = scmp.lt.s32.totalorder %s19, 3
        %s247 = scalar_select %p246, %s19, 3
        %s248 = smul.addr %s247, 8
        %s249 = scalar_lea.vmem %s1, %s248
        %p250 = scmp.lt.s32.totalorder %s19, 3
        %s251 = scalar_select %p250, %s19, 3
        %s252 = smul.addr %s251, 8
        %s253 = scalar_lea.vmem %s2, %s252
        %v254 = vld [vmem:[%s3] sm:$0x1f]
        %v255 = vld [vmem:[%s4] sm:$0x1]
        %v256 = vld [vmem:[%s245] sm:$0xff]
        %v258 = vlaneseq
        %v259 = vshrl.u32 %v258, 7
        %v260 = vsub.s32 0, %v259
        %v261 = vrot.slane %v255, %v260
        %vm263 = vcmask 39936
        %v265 = vsel %vm263, %v256, 0
        %vm267 = vcmask 1044480
        %v269 = vsel %vm267, %v254, 0
        %271 = vmatprep.subr.mxu0 0.0
        %272 = vmatpush1.msra.mxu0 0.0
        %273 = vmatprep.subr.mxu0 0.0
        %274 = vmatpush1.msra.mxu0 0.0
        %275 = vmatprep.subr.mxu0 0.0
        %276 = vmatpush1.msra.mxu0 0.0
        %277 = vmatprep.subr.mxu0 0.0
        %278 = vmatpush1.msra.mxu0 0.0
        %279 = vmatprep.subr.mxu0 0.0
        %280 = vmatpush1.msra.mxu0 0.0
        %281 = vmatprep.subr.mxu0 0.0
        %282 = vmatpush1.msra.mxu0 0.0
        %283 = vmatprep.subr.mxu0 0.0
        %284 = vmatpush1.msra.mxu0 0.0
        %285 = vmatprep.subr.mxu0 0.0
        %286 = vmatpush1.msra.mxu0 0.0
        %287 = vmatprep.subr.mxu0 0.0
        %288 = vmatpush1.msra.mxu0 0.0
        %289 = vmatprep.subr.mxu0 0.0
        %290 = vmatpush1.msra.mxu0 0.0
        %291 = vmatprep.subr.mxu0 0.0
        %292 = vmatpush1.msra.mxu0 0.0
        %293 = vmatprep.subr.mxu0 0.0
        %294 = vmatpush1.msra.mxu0 0.0
        %295 = vmatprep.subr.mxu0 0.0
        %296 = vmatpush1.msra.mxu0 0.0
        %297 = vmatprep.subr.mxu0 0.0
        %298 = vmatpush1.msra.mxu0 0.0
        %299 = vmatprep.subr.mxu0 0.0
        %300 = vmatpush1.msra.mxu0 0.0
        %301 = vmatprep.subr.mxu0 0.0
        %302 = vmatpush1.msra.mxu0 %v269
        %303 = vmatprep.subr.mxu0 0.0
        %304 = vmatpush2.msra.mxu0 0.0
        %305 = vmatprep.subr.mxu0 0.0
        %306 = vmatpush2.msra.mxu0 0.0
        %307 = vmatprep.subr.mxu0 0.0
        %308 = vmatpush2.msra.mxu0 0.0
        %309 = vmatprep.subr.mxu0 0.0
        %310 = vmatpush2.msra.mxu0 0.0
        %311 = vmatprep.subr.mxu0 0.0
        %312 = vmatpush2.msra.mxu0 0.0
        %313 = vmatprep.subr.mxu0 0.0
        %314 = vmatpush2.msra.mxu0 0.0
        %315 = vmatprep.subr.mxu0 0.0
        %316 = vmatpush2.msra.mxu0 0.0
        %317 = vmatprep.subr.mxu0 0.0
        %318 = vmatpush2.msra.mxu0 0.0
        %319 = vmatprep.subr.mxu0 0.0
        %320 = vmatpush2.msra.mxu0 0.0
        %321 = vmatprep.subr.mxu0 0.0
        %322 = vmatpush2.msra.mxu0 0.0
        %323 = vmatprep.subr.mxu0 0.0
        %324 = vmatpush2.msra.mxu0 0.0
        %325 = vmatprep.subr.mxu0 0.0
        %326 = vmatpush2.msra.mxu0 0.0
        %327 = vmatprep.subr.mxu0 0.0
        %328 = vmatpush2.msra.mxu0 0.0
        %329 = vmatprep.subr.mxu0 0.0
        %330 = vmatpush2.msra.mxu0 0.0
        %331 = vmatprep.subr.mxu0 0.0
        %332 = vmatpush2.msra.mxu0 0.0
        %333 = vmatprep.subr.mxu0 0.0
        %334 = vmatpush2.msra.mxu0 0.0
        %335 = vmatprep.mubr.f32.mxu0 0.0
        %336 = vmatmul.mubr.f32.gmra.mxu0 %v265
        %v337 = vpop.f32.mrf.mxu0
        %v338 = vadd.f32 %v261, %v337
        %v339 = vpop.f32.mrf.mxu0
        %340 = vdwg.mxu0
        %v341 = vld [vmem:[%s249] sm:$0xff]
        %v343 = vsel %vm263, %v341, 0
        %345 = vmatprep.subr.mxu0 0.0
        %346 = vmatpush1.msra.mxu0 0.0
        %347 = vmatprep.subr.mxu0 0.0
        %348 = vmatpush1.msra.mxu0 0.0
        %349 = vmatprep.subr.mxu0 0.0
        %350 = vmatpush1.msra.mxu0 0.0
        %351 = vmatprep.subr.mxu0 0.0
        %352 = vmatpush1.msra.mxu0 0.0
        %353 = vmatprep.subr.mxu0 0.0
        %354 = vmatpush1.msra.mxu0 0.0
        %355 = vmatprep.subr.mxu0 0.0
        %356 = vmatpush1.msra.mxu0 0.0
        %357 = vmatprep.subr.mxu0 0.0
        %358 = vmatpush1.msra.mxu0 0.0
        %359 = vmatprep.subr.mxu0 0.0
        %360 = vmatpush1.msra.mxu0 0.0
        %361 = vmatprep.subr.mxu0 0.0
        %362 = vmatpush1.msra.mxu0 0.0
        %363 = vmatprep.subr.mxu0 0.0
        %364 = vmatpush1.msra.mxu0 0.0
        %365 = vmatprep.subr.mxu0 0.0
        %366 = vmatpush1.msra.mxu0 0.0
        %367 = vmatprep.subr.mxu0 0.0
        %368 = vmatpush1.msra.mxu0 0.0
        %369 = vmatprep.subr.mxu0 0.0
        %370 = vmatpush1.msra.mxu0 0.0
        %371 = vmatprep.subr.mxu0 0.0
        %372 = vmatpush1.msra.mxu0 0.0
        %373 = vmatprep.subr.mxu0 0.0
        %374 = vmatpush1.msra.mxu0 0.0
        %375 = vmatprep.subr.mxu0 0.0
        %376 = vmatpush1.msra.mxu0 %v269
        %377 = vmatprep.subr.mxu0 0.0
        %378 = vmatpush2.msra.mxu0 0.0
        %379 = vmatprep.subr.mxu0 0.0
        %380 = vmatpush2.msra.mxu0 0.0
        %381 = vmatprep.subr.mxu0 0.0
        %382 = vmatpush2.msra.mxu0 0.0
        %383 = vmatprep.subr.mxu0 0.0
        %384 = vmatpush2.msra.mxu0 0.0
        %385 = vmatprep.subr.mxu0 0.0
        %386 = vmatpush2.msra.mxu0 0.0
        %387 = vmatprep.subr.mxu0 0.0
        %388 = vmatpush2.msra.mxu0 0.0
        %389 = vmatprep.subr.mxu0 0.0
        %390 = vmatpush2.msra.mxu0 0.0
        %391 = vmatprep.subr.mxu0 0.0
        %392 = vmatpush2.msra.mxu0 0.0
        %393 = vmatprep.subr.mxu0 0.0
        %394 = vmatpush2.msra.mxu0 0.0
        %395 = vmatprep.subr.mxu0 0.0
        %396 = vmatpush2.msra.mxu0 0.0
        %397 = vmatprep.subr.mxu0 0.0
        %398 = vmatpush2.msra.mxu0 0.0
        %399 = vmatprep.subr.mxu0 0.0
        %400 = vmatpush2.msra.mxu0 0.0
        %401 = vmatprep.subr.mxu0 0.0
        %402 = vmatpush2.msra.mxu0 0.0
        %403 = vmatprep.subr.mxu0 0.0
        %404 = vmatpush2.msra.mxu0 0.0
        %405 = vmatprep.subr.mxu0 0.0
        %406 = vmatpush2.msra.mxu0 0.0
        %407 = vmatprep.subr.mxu0 0.0
        %408 = vmatpush2.msra.mxu0 0.0
        %409 = vmatprep.mubr.f32.mxu0 0.0
        %410 = vmatmul.mubr.f32.gmra.mxu0 %v343
        %v411 = vpop.f32.mrf.mxu0
        %v412 = vadd.f32 %v261, %v411
        %v413 = vpop.f32.mrf.mxu0
        %414 = vdwg.mxu0
        %v415 = vld [vmem:[%s253] sm:$0xff]
        %v417 = vsel %vm263, %v415, 0
        %419 = vmatprep.subr.mxu0 0.0
        %420 = vmatpush1.msra.mxu0 0.0
        %421 = vmatprep.subr.mxu0 0.0
        %422 = vmatpush1.msra.mxu0 0.0
        %423 = vmatprep.subr.mxu0 0.0
        %424 = vmatpush1.msra.mxu0 0.0
        %425 = vmatprep.subr.mxu0 0.0
        %426 = vmatpush1.msra.mxu0 0.0
        %427 = vmatprep.subr.mxu0 0.0
        %428 = vmatpush1.msra.mxu0 0.0
        %429 = vmatprep.subr.mxu0 0.0
        %430 = vmatpush1.msra.mxu0 0.0
        %431 = vmatprep.subr.mxu0 0.0
        %432 = vmatpush1.msra.mxu0 0.0
        %433 = vmatprep.subr.mxu0 0.0
        %434 = vmatpush1.msra.mxu0 0.0
        %435 = vmatprep.subr.mxu0 0.0
        %436 = vmatpush1.msra.mxu0 0.0
        %437 = vmatprep.subr.mxu0 0.0
        %438 = vmatpush1.msra.mxu0 0.0
        %439 = vmatprep.subr.mxu0 0.0
        %440 = vmatpush1.msra.mxu0 0.0
        %441 = vmatprep.subr.mxu0 0.0
        %442 = vmatpush1.msra.mxu0 0.0
        %443 = vmatprep.subr.mxu0 0.0
        %444 = vmatpush1.msra.mxu0 0.0
        %445 = vmatprep.subr.mxu0 0.0
        %446 = vmatpush1.msra.mxu0 0.0
        %447 = vmatprep.subr.mxu0 0.0
        %448 = vmatpush1.msra.mxu0 0.0
        %449 = vmatprep.subr.mxu0 0.0
        %450 = vmatpush1.msra.mxu0 %v269
        %451 = vmatprep.subr.mxu0 0.0
        %452 = vmatpush2.msra.mxu0 0.0
        %453 = vmatprep.subr.mxu0 0.0
        %454 = vmatpush2.msra.mxu0 0.0
        %455 = vmatprep.subr.mxu0 0.0
        %456 = vmatpush2.msra.mxu0 0.0
        %457 = vmatprep.subr.mxu0 0.0
        %458 = vmatpush2.msra.mxu0 0.0
        %459 = vmatprep.subr.mxu0 0.0
        %460 = vmatpush2.msra.mxu0 0.0
        %461 = vmatprep.subr.mxu0 0.0
        %462 = vmatpush2.msra.mxu0 0.0
        %463 = vmatprep.subr.mxu0 0.0
        %464 = vmatpush2.msra.mxu0 0.0
        %465 = vmatprep.subr.mxu0 0.0
        %466 = vmatpush2.msra.mxu0 0.0
        %467 = vmatprep.subr.mxu0 0.0
        %468 = vmatpush2.msra.mxu0 0.0
        %469 = vmatprep.subr.mxu0 0.0
        %470 = vmatpush2.msra.mxu0 0.0
        %471 = vmatprep.subr.mxu0 0.0
        %472 = vmatpush2.msra.mxu0 0.0
        %473 = vmatprep.subr.mxu0 0.0
        %474 = vmatpush2.msra.mxu0 0.0
        %475 = vmatprep.subr.mxu0 0.0
        %476 = vmatpush2.msra.mxu0 0.0
        %477 = vmatprep.subr.mxu0 0.0
        %478 = vmatpush2.msra.mxu0 0.0
        %479 = vmatprep.subr.mxu0 0.0
        %480 = vmatpush2.msra.mxu0 0.0
        %481 = vmatprep.subr.mxu0 0.0
        %482 = vmatpush2.msra.mxu0 0.0
        %483 = vmatprep.mubr.f32.mxu0 0.0
        %484 = vmatmul.mubr.f32.gmra.mxu0 %v417
        %v485 = vpop.f32.mrf.mxu0
        %v486 = vadd.f32 %v261, %v485
        %v487 = vpop.f32.mrf.mxu0
        %488 = vdwg.mxu0
        %vm489 = vcmask 80896
        %v491 = vsel %vm489, %v338, 0
        %v494 = vsel %vm489, %v412, 0
        %496 = vmatprep.subr.mxu0 0.0
        %497 = vmatpush1.xpose.msra.mxu0 0.0
        %498 = vmatprep.subr.mxu0 0.0
        %499 = vmatpush1.xpose.msra.mxu0 0.0
        %500 = vmatprep.subr.mxu0 0.0
        %501 = vmatpush1.xpose.msra.mxu0 0.0
        %502 = vmatprep.subr.mxu0 0.0
        %503 = vmatpush1.xpose.msra.mxu0 0.0
        %504 = vmatprep.subr.mxu0 0.0
        %505 = vmatpush1.xpose.msra.mxu0 0.0
        %506 = vmatprep.subr.mxu0 0.0
        %507 = vmatpush1.xpose.msra.mxu0 0.0
        %508 = vmatprep.subr.mxu0 0.0
        %509 = vmatpush1.xpose.msra.mxu0 0.0
        %510 = vmatprep.subr.mxu0 0.0
        %511 = vmatpush1.xpose.msra.mxu0 0.0
        %512 = vmatprep.subr.mxu0 0.0
        %513 = vmatpush1.xpose.msra.mxu0 0.0
        %514 = vmatprep.subr.mxu0 0.0
        %515 = vmatpush1.xpose.msra.mxu0 0.0
        %516 = vmatprep.subr.mxu0 0.0
        %517 = vmatpush1.xpose.msra.mxu0 0.0
        %518 = vmatprep.subr.mxu0 0.0
        %519 = vmatpush1.xpose.msra.mxu0 0.0
        %520 = vmatprep.subr.mxu0 0.0
        %521 = vmatpush1.xpose.msra.mxu0 0.0
        %522 = vmatprep.subr.mxu0 0.0
        %523 = vmatpush1.xpose.msra.mxu0 0.0
        %524 = vmatprep.subr.mxu0 0.0
        %525 = vmatpush1.xpose.msra.mxu0 0.0
        %526 = vmatprep.subr.mxu0 0.0
        %527 = vmatpush1.xpose.msra.mxu0 %v494
        %528 = vmatprep.subr.mxu0 0.0
        %529 = vmatpush2.xpose.msra.mxu0 0.0
        %530 = vmatprep.subr.mxu0 0.0
        %531 = vmatpush2.xpose.msra.mxu0 0.0
        %532 = vmatprep.subr.mxu0 0.0
        %533 = vmatpush2.xpose.msra.mxu0 0.0
        %534 = vmatprep.subr.mxu0 0.0
        %535 = vmatpush2.xpose.msra.mxu0 0.0
        %536 = vmatprep.subr.mxu0 0.0
        %537 = vmatpush2.xpose.msra.mxu0 0.0
        %538 = vmatprep.subr.mxu0 0.0
        %539 = vmatpush2.xpose.msra.mxu0 0.0
        %540 = vmatprep.subr.mxu0 0.0
        %541 = vmatpush2.xpose.msra.mxu0 0.0
        %542 = vmatprep.subr.mxu0 0.0
        %543 = vmatpush2.xpose.msra.mxu0 0.0
        %544 = vmatprep.subr.mxu0 0.0
        %545 = vmatpush2.xpose.msra.mxu0 0.0
        %546 = vmatprep.subr.mxu0 0.0
        %547 = vmatpush2.xpose.msra.mxu0 0.0
        %548 = vmatprep.subr.mxu0 0.0
        %549 = vmatpush2.xpose.msra.mxu0 0.0
        %550 = vmatprep.subr.mxu0 0.0
        %551 = vmatpush2.xpose.msra.mxu0 0.0
        %552 = vmatprep.subr.mxu0 0.0
        %553 = vmatpush2.xpose.msra.mxu0 0.0
        %554 = vmatprep.subr.mxu0 0.0
        %555 = vmatpush2.xpose.msra.mxu0 0.0
        %556 = vmatprep.subr.mxu0 0.0
        %557 = vmatpush2.xpose.msra.mxu0 0.0
        %558 = vmatprep.subr.mxu0 0.0
        %559 = vmatpush2.xpose.msra.mxu0 0.0
        %560 = vmatprep.mubr.f32.mxu0 0.0
        %561 = vmatmul.mubr.f32.gmra.mxu0 %v491
        %v562 = vpop.f32.mrf.mxu0
        %v563 = vadd.f32 0.0, %v562
        %v564 = vpop.f32.mrf.mxu0
        %565 = vdwg.mxu0
        %v566 = vmul.f32 %v563, 0.1
        %vm567 = vcmask 64512
        %v568 = vsel %vm567, %v566, -inf
        %569 = vmax.xlane.f32.xlu0 %v568
        %v570 = vpop.xlane.xlu0 %569
        %v571 = vsub.f32 %v566, %v570
        %v572 = vmul.f32 %v571, 1.442695
        %v573 = vpow.pop %v572
        %v574 = vsel %vm567, %v573, 0.0
        %575 = vadd.xlane.f32.xlu0 %v574
        %v576 = vpop.xlane.xlu0 %575
        %v577 = vrcp.pop %v576
        %v578 = vmul.f32 %v573, %v577
        %v580 = vsel %vm567, %v578, 0
        %582 = vmatprep.subr.mxu0 0.0
        %583 = vmatpush1.msra.mxu0 0.0
        %584 = vmatprep.subr.mxu0 0.0
        %585 = vmatpush1.msra.mxu0 0.0
        %586 = vmatprep.subr.mxu0 0.0
        %587 = vmatpush1.msra.mxu0 0.0
        %588 = vmatprep.subr.mxu0 0.0
        %589 = vmatpush1.msra.mxu0 0.0
        %590 = vmatprep.subr.mxu0 0.0
        %591 = vmatpush1.msra.mxu0 0.0
        %592 = vmatprep.subr.mxu0 0.0
        %593 = vmatpush1.msra.mxu0 0.0
        %594 = vmatprep.subr.mxu0 0.0
        %595 = vmatpush1.msra.mxu0 0.0
        %596 = vmatprep.subr.mxu0 0.0
        %597 = vmatpush1.msra.mxu0 0.0
        %598 = vmatprep.subr.mxu0 0.0
        %599 = vmatpush1.msra.mxu0 0.0
        %600 = vmatprep.subr.mxu0 0.0
        %601 = vmatpush1.msra.mxu0 0.0
        %602 = vmatprep.subr.mxu0 0.0
        %603 = vmatpush1.msra.mxu0 0.0
        %604 = vmatprep.subr.mxu0 0.0
        %605 = vmatpush1.msra.mxu0 0.0
        %606 = vmatprep.subr.mxu0 0.0
        %607 = vmatpush1.msra.mxu0 0.0
        %608 = vmatprep.subr.mxu0 0.0
        %609 = vmatpush1.msra.mxu0 0.0
        %610 = vmatprep.subr.mxu0 0.0
        %611 = vmatpush1.msra.mxu0 0.0
        %612 = vmatprep.subr.mxu0 0.0
        %613 = vmatpush1.msra.mxu0 %v486
        %614 = vmatprep.subr.mxu0 0.0
        %615 = vmatpush2.msra.mxu0 0.0
        %616 = vmatprep.subr.mxu0 0.0
        %617 = vmatpush2.msra.mxu0 0.0
        %618 = vmatprep.subr.mxu0 0.0
        %619 = vmatpush2.msra.mxu0 0.0
        %620 = vmatprep.subr.mxu0 0.0
        %621 = vmatpush2.msra.mxu0 0.0
        %622 = vmatprep.subr.mxu0 0.0
        %623 = vmatpush2.msra.mxu0 0.0
        %624 = vmatprep.subr.mxu0 0.0
        %625 = vmatpush2.msra.mxu0 0.0
        %626 = vmatprep.subr.mxu0 0.0
        %627 = vmatpush2.msra.mxu0 0.0
        %628 = vmatprep.subr.mxu0 0.0
        %629 = vmatpush2.msra.mxu0 0.0
        %630 = vmatprep.subr.mxu0 0.0
        %631 = vmatpush2.msra.mxu0 0.0
        %632 = vmatprep.subr.mxu0 0.0
        %633 = vmatpush2.msra.mxu0 0.0
        %634 = vmatprep.subr.mxu0 0.0
        %635 = vmatpush2.msra.mxu0 0.0
        %636 = vmatprep.subr.mxu0 0.0
        %637 = vmatpush2.msra.mxu0 0.0
        %638 = vmatprep.subr.mxu0 0.0
        %639 = vmatpush2.msra.mxu0 0.0
        %640 = vmatprep.subr.mxu0 0.0
        %641 = vmatpush2.msra.mxu0 0.0
        %642 = vmatprep.subr.mxu0 0.0
        %643 = vmatpush2.msra.mxu0 0.0
        %644 = vmatprep.subr.mxu0 0.0
        %645 = vmatpush2.msra.mxu0 0.0
        %646 = vmatprep.mubr.f32.mxu0 0.0
        %647 = vmatmul.mubr.f32.gmra.mxu0 %v580
        %v648 = vpop.f32.mrf.mxu0
        %v649 = vadd.f32 0.0, %v648
        %v650 = vpop.f32.mrf.mxu0
        %651 = vdwg.mxu0
        %652 = vst.msk [vmem:[%s241] sm:$0xff] %vm489, %v649
        %s653 = sand.u32 %s147, 1
        %s654 = scalar_lea.sflag [#allocation3], %s653
        %s655 = sand.u32 %s147, 1
        %s656 = smul.addr %s655, 8
        %s657 = scalar_lea.vmem [#allocation2], %s656
        // Predicated region
        $region41: #{tpu_custom_call.1} parent=39 // pred_check
          %p658 = pneg %p157
        $region42: #{tpu_custom_call.1} parent=39 // pred_check_branch
          %660 = sbr.rel (%p658) target = $region44
        $region43: #{tpu_custom_call.1} parent=39 // pred_region
          %s662 = ssub.s32 128, 128
          %663 = vsyncadd %s654, %s662
          %s664 = smul.addr %s19, 128
          %s665 = scalar_lea.hbm %s5, %s664
          %s667 = sshll.u32 %s657, 4
          %s668 = int_to_ptr.vmem [resolvable:$true] %s667
          %670 = dma.vmem_to_hbm [thread:$0]  %s668, 128, %s665, %s654
        $region44: #{tpu_custom_call.1} parent=39 // pred_fallthru
          _
      $region40: #{tpu_custom_call.1} parent=5 // pred_fallthru
        _
      %p671 = scmp.le.s32.totalorder 2, %s14
      // Predicated region
      $region45: #{tpu_custom_call.1} parent=5 // pred_check
        %p672 = pneg %p671
      $region46: #{tpu_custom_call.1} parent=5 // pred_check_branch
        %674 = sbr.rel (%p672) target = $region48
      $region47: #{tpu_custom_call.1} parent=5 // pred_region
        %s675 = ssub.s32 %s14, 2
        // Predicated region
        $region49: #{tpu_custom_call.1} parent=47 // pred_check
          %p676 = pneg %p163
        $region50: #{tpu_custom_call.1} parent=47 // pred_check_branch
          %678 = sbr.rel (%p676) target = $region52
        $region51: #{tpu_custom_call.1} parent=47 // pred_region
          %s679 = sand.u32 %s148, 1
          %s680 = scalar_lea.sflag [#allocation3], %s679
          %s681 = sand.u32 %s148, 1
          %s682 = smul.addr %s681, 8
          %s683 = scalar_lea.vmem [#allocation2], %s682
          %684 = dma.done %s680, 128
        $region52: #{tpu_custom_call.1} parent=47 // pred_fallthru
          _
      $region48: #{tpu_custom_call.1} parent=5 // pred_fallthru
        _
    $region6: #{tpu_custom_call.1} parent=1 // loop_footer
      %s18 = sadd.s32 1, %s14
    $region7: #{tpu_custom_call.1} parent=1 // loop_footer_branch
      %13 = sbr.rel target = $region3
    $region8: #{tpu_custom_call.1} parent=1 // loop_exit
      _
    %685 = vsyncpa [#allocation3], 1
    %s686 = scalar_lea.sflag [#allocation3], 1
    %687 = vsyncpa %s686, 1

</llo_original>
